<compile_context>
chip_gen: v7x
topology: tpu7x:2x2x1
jax: 0.10.0
libtpu: 0.0.40
codegen_flags: <defaults>
</compile_context>

<pallas_src>
import functools

import jax
import jax.numpy as jnp
from jax.experimental import pallas as pl
from jax.experimental.pallas import tpu as pltpu


def _round_up(x, m):
    return ((x + m - 1) // m) * m


def _make_lr_kernel(s_chunk, approx_recip):
    def lr_kernel(x_ref, sl_ref, emb_ref, w_ref, b_ref, out_ref):
        TB, SP = x_ref.shape
        NV = emb_ref.shape[0]
        n_chunks = SP // s_chunk

        # Vocab iota hoisted out of the chunk loop (JAX does not CSE broadcasts).
        vocab = jax.lax.broadcasted_iota(jnp.int32, (TB, s_chunk, NV), 2)

        # ---- bag-of-words counts, streamed over the sequence in chunks (VPU) ----------
        counts = jnp.zeros((TB, NV), jnp.float32)
        for c in range(n_chunks):  # static trip count -> fully unrolled straight-line code
            ids = x_ref[:, c * s_chunk:(c + 1) * s_chunk][:, :, None]      # (TB, sc, 1)
            counts = counts + jnp.sum((ids == vocab).astype(jnp.float32), axis=1)

        # ---- fused embedding lookup + sum-pool: ONE MXU matmul ------------------------
        rep = jnp.dot(counts.astype(emb_ref.dtype), emb_ref[...],
                      preferred_element_type=jnp.float32)                  # (TB, EP) f32

        # ---- mean: fold 1/sl into rep (TB*E multiplies, counts stay integral) ---------
        inv_sl = pl.reciprocal(sl_ref[...], approx=approx_recip)           # (TB, 1)
        rep = rep * inv_sl

        # ---- classifier head: second MXU matmul, lane-dense padded output -------------
        out_ref[...] = jnp.dot(rep.astype(w_ref.dtype), w_ref[...],
                               preferred_element_type=jnp.float32) + b_ref[...]

    return lr_kernel


def lr_forward(x, sl, emb_table, w, b, *, block_b=128, s_chunk=None, use_bf16=True):
    """x: (B, S) int32 token ids, sl: (B,) float32 sequence lengths,
    emb_table: (n_emb, E), w: (E, n_cls) [= PyTorch fc.weight.T], b: (n_cls,)
    -> logits (B, n_cls) float32."""
    B, S = x.shape
    n_emb, E = emb_table.shape
    n_cls = w.shape[1]

    # Lane-dense padding: vocab (matmul K), embedding dim and class dim -> multiples of 128.
    NV = _round_up(n_emb, 128)
    EP = _round_up(E, 128)
    NC = _round_up(n_cls, 128)

    # ---- per-generation VMEM budget -----------------------------------------------------
    try:
        vmem_cap = int(pltpu.get_tpu_info().vmem_capacity_bytes)
    except Exception:
        vmem_cap = 64 * 1024 * 1024          # conservative: v7x per-TC physical VMEM
    vmem_limit = min(int(vmem_cap * 0.8), 112 * 1024 * 1024)
    tile_budget = int(vmem_limit * 0.7)      # headroom for compiler-internal scratch

    tbl_bytes = 2 if use_bf16 else 4
    resident = 2 * (NV * EP + EP * NC) * tbl_bytes + 2 * 8 * NC * 4   # double-buffered tables

    # ---- batch tile: large, multiple of 8, >=2 grid steps when possible (v7x 2 TCs) ----
    block_b = max(8, min(_round_up(block_b, 8), _round_up(B, 8)))
    if _round_up(B, block_b) // block_b < 2 and block_b > 8:
        block_b = max(8, _round_up(block_b // 2, 8))

    # ---- sequence chunk for streamed counts accumulation --------------------------------
    if s_chunk is None:
        s_chunk = 8
        while (s_chunk * 2 <= _round_up(S, 8)
               and block_b * (s_chunk * 2) * NV * 4 <= 4 * 1024 * 1024):
            s_chunk *= 2
    else:
        s_chunk = max(8, _round_up(s_chunk, 8))
    SP = _round_up(S, s_chunk)

    def _fits(tb):
        stream = 2 * (tb * SP * 4 + tb * 128 * 4 + tb * NC * 4)       # x / sl / out streams
        scratch = 2 * tb * s_chunk * NV * 4 + tb * (NV + EP + NC) * 8  # iota, chunk, counts, rep
        return resident + stream + scratch <= tile_budget

    while block_b > 8 and not _fits(block_b):
        block_b = max(8, _round_up(block_b // 2, 8))

    Bp = _round_up(B, block_b)

    # ---- host-side padding ----------------------------------------------------------------
    # Sequence/batch padding uses sentinel id == NV (out of [0, NV)) -> contributes nothing.
    x_p = jnp.pad(x.astype(jnp.int32), ((0, Bp - B), (0, SP - S)), constant_values=NV)
    sl_p = jnp.pad(sl.astype(jnp.float32).reshape(B, 1), ((0, Bp - B), (0, 0)),
                   constant_values=1.0)
    tbl_dtype = jnp.bfloat16 if use_bf16 else jnp.float32
    emb_p = jnp.pad(emb_table.astype(jnp.float32),
                    ((0, NV - n_emb), (0, EP - E))).astype(tbl_dtype)
    w_p = jnp.pad(w.astype(jnp.float32),
                  ((0, EP - E), (0, NC - n_cls))).astype(tbl_dtype)
    b_p = jnp.pad(b.astype(jnp.float32).reshape(1, n_cls), ((0, 0), (0, NC - n_cls)))

    out = pl.pallas_call(
        _make_lr_kernel(s_chunk, approx_recip=use_bf16),
        out_shape=jax.ShapeDtypeStruct((Bp, NC), jnp.float32),
        grid_spec=pltpu.PrefetchScalarGridSpec(
            num_scalar_prefetch=0,
            grid=(Bp // block_b,),
            in_specs=[
                pl.BlockSpec((block_b, SP), lambda i: (i, 0)),   # token ids, batch-tiled
                pl.BlockSpec((block_b, 1), lambda i: (i, 0)),    # sequence lengths
                pl.BlockSpec((NV, EP), lambda i: (0, 0)),        # emb table, VMEM-resident
                pl.BlockSpec((EP, NC), lambda i: (0, 0)),        # fc weight, VMEM-resident
                pl.BlockSpec((1, NC), lambda i: (0, 0)),         # fc bias, VMEM-resident
            ],
            out_specs=pl.BlockSpec((block_b, NC), lambda i: (i, 0)),
        ),
        compiler_params=pltpu.CompilerParams(
            dimension_semantics=("parallel",),                   # megacore-shardable
            vmem_limit_bytes=vmem_limit,
        ),
    )(x_p, sl_p, emb_p, w_p, b_p)

    return out[:B, :n_cls]


def lr_reference(x, sl, emb_table, w, b):
    emb = jnp.take(emb_table, x, axis=0)            # (B, S, E)
    rep = jnp.sum(emb, axis=1) / sl[:, None]        # (B, E)
    return rep @ w + b[None, :]                     # (B, n_cls)


if __name__ == "__main__":
    # Small shapes consistent with the module's forward.
    B, S = 2, 8
    n_emb, emb_dim, n_cls = 32, 32, 4

    key = jax.random.PRNGKey(0)
    k_x, k_emb, k_w, k_b = jax.random.split(key, 4)

    x = jax.random.randint(k_x, (B, S), 0, n_emb, dtype=jnp.int32)
    sl = jnp.array([S, S // 2], dtype=jnp.float32)          # sequence lengths
    emb_table = jax.random.normal(k_emb, (n_emb, emb_dim), dtype=jnp.float32)
    # PyTorch nn.Linear weight is (n_cls, emb_dim); we store its transpose.
    w = jax.random.normal(k_w, (emb_dim, n_cls), dtype=jnp.float32) * 0.1
    b = jax.random.normal(k_b, (n_cls,), dtype=jnp.float32) * 0.1

    ref = lr_reference(x, sl, emb_table, w, b)

    # Default fast path: bf16 MXU operands (loose tolerance vs the f32 reference).
    out_bf16 = jax.block_until_ready(lr_forward(x, sl, emb_table, w, b, use_bf16=True))
    assert out_bf16.shape == (B, n_cls)
    assert jnp.allclose(out_bf16, ref, atol=2e-2, rtol=2e-2), "bf16 path mismatch vs reference"

    # Exact path: f32 MXU operands, exact reciprocal.
    out_f32 = jax.block_until_ready(lr_forward(x, sl, emb_table, w, b, use_bf16=False))
    assert out_f32.shape == (B, n_cls)
    assert jnp.allclose(out_f32, ref, atol=1e-4, rtol=1e-4), "f32 path mismatch vs reference"

    print("KERNEL_OK")
</pallas_src>

<mosaic_0001>
module attributes {stable_mosaic.version = 11 : i64} {
  func.func @lr_kernel(%arg0: i32, %arg1: memref<8x8xi32, #tpu.memory_space<vmem>>, %arg2: memref<8x1xf32, #tpu.memory_space<vmem>>, %arg3: memref<128x128xbf16, #tpu.memory_space<vmem>>, %arg4: memref<128x128xbf16, #tpu.memory_space<vmem>>, %arg5: memref<1x128xf32, #tpu.memory_space<vmem>>, %arg6: memref<8x128xf32, #tpu.memory_space<vmem>>) attributes {dimension_semantics = [#tpu.dimension_semantics<parallel>], iteration_bounds = array<i64: 1>, scalar_prefetch = 0 : i64, scratch_operands = 0 : i64, tpu.core_type = #tpu.core_type<tc>, window_params = [{transform_indices = @transform_0, window_bounds = array<i64: 8, 8>}, {transform_indices = @transform_1, window_bounds = array<i64: 8, 1>}, {pipeline_mode = #tpu.pipeline_mode<synchronous>, transform_indices = @transform_2, window_bounds = array<i64: 128, 128>}, {pipeline_mode = #tpu.pipeline_mode<synchronous>, transform_indices = @transform_3, window_bounds = array<i64: 128, 128>}, {pipeline_mode = #tpu.pipeline_mode<synchronous>, transform_indices = @transform_4, window_bounds = array<i64: 1, 128>}, {transform_indices = @transform_5, window_bounds = array<i64: 8, 128>}]} {
    %0 = tpu.iota {dimensions = array<i32: 2>} : vector<8x8x128xi32>
    %cst = arith.constant 0.000000e+00 : f32
    %1 = vector.broadcast %cst : f32 to vector<8x128xf32>
    %c0 = arith.constant 0 : index
    %c0_0 = arith.constant 0 : index
    %2 = vector.load %arg1[%c0, %c0_0] : memref<8x8xi32, #tpu.memory_space<vmem>>, vector<8x8xi32>
    %3 = vector.shape_cast %2 : vector<8x8xi32> to vector<8x8x1xi32>
    %4 = vector.broadcast %3 : vector<8x8x1xi32> to vector<8x8x128xi32>
    %5 = arith.cmpi eq, %4, %0 : vector<8x8x128xi32>
    %6 = arith.extui %5 : vector<8x8x128xi1> to vector<8x8x128xi32>
    %7 = arith.sitofp %6 : vector<8x8x128xi32> to vector<8x8x128xf32>
    %cst_1 = arith.constant dense<0.000000e+00> : vector<8x128xf32>
    %8 = vector.multi_reduction <add>, %7, %cst_1 [1] : vector<8x8x128xf32> to vector<8x128xf32>
    %9 = arith.addf %1, %8 : vector<8x128xf32>
    %10 = arith.truncf %9 : vector<8x128xf32> to vector<8x128xbf16>
    %c0_2 = arith.constant 0 : index
    %c0_3 = arith.constant 0 : index
    %11 = vector.load %arg3[%c0_2, %c0_3] : memref<128x128xbf16, #tpu.memory_space<vmem>>, vector<128x128xbf16>
    %cst_4 = arith.constant dense<0.000000e+00> : vector<8x128xf32>
    %12 = tpu.matmul %10, %11, %cst_4 {dimension_numbers = #tpu.dot_dimension_numbers<[1], [0], [0], [1], [0, 0, 1, 1], [], []>} : vector<8x128xbf16>, vector<128x128xbf16>, vector<8x128xf32> -> vector<8x128xf32>
    %c0_5 = arith.constant 0 : index
    %c0_6 = arith.constant 0 : index
    %13 = vector.load %arg2[%c0_5, %c0_6] : memref<8x1xf32, #tpu.memory_space<vmem>>, vector<8x1xf32>
    %14 = tpu.reciprocal %13 {approx = true} : vector<8x1xf32> -> vector<8x1xf32>
    %15 = vector.broadcast %14 : vector<8x1xf32> to vector<8x128xf32>
    %16 = arith.mulf %12, %15 : vector<8x128xf32>
    %17 = arith.truncf %16 : vector<8x128xf32> to vector<8x128xbf16>
    %c0_7 = arith.constant 0 : index
    %c0_8 = arith.constant 0 : index
    %18 = vector.load %arg4[%c0_7, %c0_8] : memref<128x128xbf16, #tpu.memory_space<vmem>>, vector<128x128xbf16>
    %cst_9 = arith.constant dense<0.000000e+00> : vector<8x128xf32>
    %19 = tpu.matmul %17, %18, %cst_9 {dimension_numbers = #tpu.dot_dimension_numbers<[1], [0], [0], [1], [0, 0, 1, 1], [], []>} : vector<8x128xbf16>, vector<128x128xbf16>, vector<8x128xf32> -> vector<8x128xf32>
    %c0_10 = arith.constant 0 : index
    %c0_11 = arith.constant 0 : index
    %20 = vector.load %arg5[%c0_10, %c0_11] : memref<1x128xf32, #tpu.memory_space<vmem>>, vector<1x128xf32>
    %21 = vector.broadcast %20 : vector<1x128xf32> to vector<8x128xf32>
    %22 = arith.addf %19, %21 : vector<8x128xf32>
    %c0_12 = arith.constant 0 : index
    %c0_13 = arith.constant 0 : index
    %23 = vector.load %arg6[%c0_12, %c0_13] : memref<8x128xf32, #tpu.memory_space<vmem>>, vector<8x128xf32>
    tpu.vector_store %arg6[%c0_12, %c0_13], %22 {strides = array<i32>} : memref<8x128xf32, #tpu.memory_space<vmem>>, vector<8x128xf32>,
    return
  }
  func.func @transform_0(%arg0: i32) -> (i32, i32) {
    %c0_i32 = arith.constant 0 : i32
    %c0_i32_0 = arith.constant 0 : i32
    return %arg0, %c0_i32 : i32, i32
  }
  func.func @transform_1(%arg0: i32) -> (i32, i32) {
    %c0_i32 = arith.constant 0 : i32
    %c0_i32_0 = arith.constant 0 : i32
    return %arg0, %c0_i32 : i32, i32
  }
  func.func @transform_2(%arg0: i32) -> (i32, i32) {
    %c0_i32 = arith.constant 0 : i32
    %c0_i32_0 = arith.constant 0 : i32
    %c0_i32_1 = arith.constant 0 : i32
    return %c0_i32, %c0_i32_0 : i32, i32
  }
  func.func @transform_3(%arg0: i32) -> (i32, i32) {
    %c0_i32 = arith.constant 0 : i32
    %c0_i32_0 = arith.constant 0 : i32
    %c0_i32_1 = arith.constant 0 : i32
    return %c0_i32, %c0_i32_0 : i32, i32
  }
  func.func @transform_4(%arg0: i32) -> (i32, i32) {
    %c0_i32 = arith.constant 0 : i32
    %c0_i32_0 = arith.constant 0 : i32
    %c0_i32_1 = arith.constant 0 : i32
    return %c0_i32, %c0_i32_0 : i32, i32
  }
  func.func @transform_5(%arg0: i32) -> (i32, i32) {
    %c0_i32 = arith.constant 0 : i32
    %c0_i32_0 = arith.constant 0 : i32
    return %arg0, %c0_i32 : i32, i32
  }
}

</mosaic_0001>

<llo_original>
// kernel: tpu_custom_call.1
$region0: #{tpu_custom_call.1}
  #allocation0 [shape = 'u32[]', space=smem, size = 0x4, offset = 0x4, fixed_abs, tag = 'smem constant byte address 0x4 - core index']
  #allocation1 [shape = 'u32[144,128]{1,0:T(1,128)}', space=vmem, size = 0x12000, scoped, tag = 'internal scratch']
  %s0 = inlined_call_operand.vmem [shape: s32[8,8], index: 0, kind: input, shape index: {}]
  %s1 = inlined_call_operand.vmem [shape: f32[8,1], index: 1, kind: input, shape index: {}]
  %s2 = inlined_call_operand.hbm [shape: bf16[128,128], index: 2, kind: input, shape index: {}]
  %s3 = inlined_call_operand.hbm [shape: bf16[128,128], index: 3, kind: input, shape index: {}]
  %s4 = inlined_call_operand.vmem [shape: f32[1,128], index: 4, kind: input, shape index: {}]
  %s5 = inlined_call_operand.hbm [shape: f32[8,128], index: 5, kind: output, shape index: {}]
  %s6 = sld [smem:[#allocation0]]
  $region38: #{tpu_custom_call.1} parent=0
    _
  %s8 = ssub.s32 1, %s6
  %s9 = scalar_select 0, %s8, %s6
  $region1: #{tpu_custom_call.1} parent=0
    #allocation2 [shape = 'u8[32768]{0}', space=vmem, size = 0x8000, scoped, tag = 'input window, operand 2, single buffered']
    #allocation3 [shape = 's32[1]{0}', space=sflag, size = 0x4, scoped, tag = 'scoped memory for tpu_custom_call.1']
    #allocation4 [shape = 's32[1]{0}', space=sflag, size = 0x4, scoped, tag = 'scoped memory for tpu_custom_call.1']
    #allocation5 [shape = 'u8[32768]{0}', space=vmem, size = 0x8000, scoped, tag = 'input window, operand 3, single buffered']
    #allocation6 [shape = 's32[1]{0}', space=sflag, size = 0x4, scoped, tag = 'scoped memory for tpu_custom_call.1']
    #allocation7 [shape = 'u8[4096]{0}', space=vmem, size = 0x1000, scoped, tag = 'output window, operand 0, single buffered']
    %10 = vsyncpa [#allocation3], 0
    %11 = vsyncpa [#allocation6], 0
    %12 = vsyncpa [#allocation4], 0
    // Predicated region
    $region2: #{tpu_custom_call.1} parent=1 // pred_check
      _
    $region3: #{tpu_custom_call.1} parent=1 // pred_check_branch
      %14 = sbr.rel (0) target = $region5
    $region4: #{tpu_custom_call.1} parent=1 // pred_region
      _
    $region5: #{tpu_custom_call.1} parent=1 // pred_fallthru
      _
    // Predicated region
    $region6: #{tpu_custom_call.1} parent=1 // pred_check
      _
    $region7: #{tpu_custom_call.1} parent=1 // pred_check_branch
      %16 = sbr.rel (0) target = $region9
    $region8: #{tpu_custom_call.1} parent=1 // pred_region
      _
    $region9: #{tpu_custom_call.1} parent=1 // pred_fallthru
      _
    // Predicated region
    $region10: #{tpu_custom_call.1} parent=1 // pred_check
      _
    $region11: #{tpu_custom_call.1} parent=1 // pred_check_branch
      %18 = sbr.rel (0) target = $region13
    $region12: #{tpu_custom_call.1} parent=1 // pred_region
      %s20 = ssub.s32 1024, 1024
      %21 = vsyncadd [#allocation3], %s20
      %s22 = sshll.u32 [#allocation2], 4
      %s23 = int_to_ptr.vmem [resolvable:$true] %s22
      %28 = dma.hbm_to_vmem [thread:$0]  %s2, 1024, %s23, [#allocation3], 64, 64, 4
    $region13: #{tpu_custom_call.1} parent=1 // pred_fallthru
      _
    // Predicated region
    $region14: #{tpu_custom_call.1} parent=1 // pred_check
      _
    $region15: #{tpu_custom_call.1} parent=1 // pred_check_branch
      %30 = sbr.rel (0) target = $region17
    $region16: #{tpu_custom_call.1} parent=1 // pred_region
      %s32 = ssub.s32 1024, 1024
      %33 = vsyncadd [#allocation6], %s32
      %s34 = sshll.u32 [#allocation5], 4
      %s35 = int_to_ptr.vmem [resolvable:$true] %s34
      %40 = dma.hbm_to_vmem [thread:$0]  %s3, 1024, %s35, [#allocation6], 64, 64, 4
    $region17: #{tpu_custom_call.1} parent=1 // pred_fallthru
      _
    // Predicated region
    $region18: #{tpu_custom_call.1} parent=1 // pred_check
      _
    $region19: #{tpu_custom_call.1} parent=1 // pred_check_branch
      %42 = sbr.rel (0) target = $region21
    $region20: #{tpu_custom_call.1} parent=1 // pred_region
      _
    $region21: #{tpu_custom_call.1} parent=1 // pred_fallthru
      _
    // Predicated region
    $region22: #{tpu_custom_call.1} parent=1 // pred_check
      _
    $region23: #{tpu_custom_call.1} parent=1 // pred_check_branch
      %44 = sbr.rel (0) target = $region25
    $region24: #{tpu_custom_call.1} parent=1 // pred_region
      %45 = dma.done [#allocation3], 1024
    $region25: #{tpu_custom_call.1} parent=1 // pred_fallthru
      _
    // Predicated region
    $region26: #{tpu_custom_call.1} parent=1 // pred_check
      _
    $region27: #{tpu_custom_call.1} parent=1 // pred_check_branch
      %47 = sbr.rel (0) target = $region29
    $region28: #{tpu_custom_call.1} parent=1 // pred_region
      %48 = dma.done [#allocation6], 1024
    $region29: #{tpu_custom_call.1} parent=1 // pred_fallthru
      _
    %v50 = vlaneseq
    %v51 = vand.u32 %v50, 127
    %v52 = vld [vmem:[%s0] sm:$0xff]
    %v53 = vlaneseq
    %v54 = vshrl.u32 %v53, 7
    %v55 = vsub.s32 0, %v54
    %v56 = vrot.slane %v52, %v55
    %58 = vbcast.lane.b32.xlu0 %v56, 256
    %v59 = vpop.permute.xlu0 %58
    %v60 = vlaneseq
    %v61 = vshrl.u32 %v60, 7
    %v62 = vsub.s32 1, %v61
    %v63 = vrot.slane %v52, %v62
    %65 = vbcast.lane.b32.xlu0 %v63, 256
    %v66 = vpop.permute.xlu0 %65
    %v67 = vlaneseq
    %v68 = vshrl.u32 %v67, 7
    %v69 = vsub.s32 2, %v68
    %v70 = vrot.slane %v52, %v69
    %72 = vbcast.lane.b32.xlu0 %v70, 256
    %v73 = vpop.permute.xlu0 %72
    %v74 = vlaneseq
    %v75 = vshrl.u32 %v74, 7
    %v76 = vsub.s32 3, %v75
    %v77 = vrot.slane %v52, %v76
    %79 = vbcast.lane.b32.xlu0 %v77, 256
    %v80 = vpop.permute.xlu0 %79
    %v81 = vlaneseq
    %v82 = vshrl.u32 %v81, 7
    %v83 = vsub.s32 4, %v82
    %v84 = vrot.slane %v52, %v83
    %86 = vbcast.lane.b32.xlu0 %v84, 256
    %v87 = vpop.permute.xlu0 %86
    %v88 = vlaneseq
    %v89 = vshrl.u32 %v88, 7
    %v90 = vsub.s32 5, %v89
    %v91 = vrot.slane %v52, %v90
    %93 = vbcast.lane.b32.xlu0 %v91, 256
    %v94 = vpop.permute.xlu0 %93
    %v95 = vlaneseq
    %v96 = vshrl.u32 %v95, 7
    %v97 = vsub.s32 6, %v96
    %v98 = vrot.slane %v52, %v97
    %100 = vbcast.lane.b32.xlu0 %v98, 256
    %v101 = vpop.permute.xlu0 %100
    %v102 = vlaneseq
    %v103 = vshrl.u32 %v102, 7
    %v104 = vsub.s32 7, %v103
    %v105 = vrot.slane %v52, %v104
    %107 = vbcast.lane.b32.xlu0 %v105, 256
    %v108 = vpop.permute.xlu0 %107
    %vm109 = vcmp.eq.s32.totalorder %v59, %v51
    %vm110 = vcmp.eq.s32.totalorder %v66, %v51
    %vm111 = vcmp.eq.s32.totalorder %v73, %v51
    %vm112 = vcmp.eq.s32.totalorder %v80, %v51
    %vm113 = vcmp.eq.s32.totalorder %v87, %v51
    %vm114 = vcmp.eq.s32.totalorder %v94, %v51
    %vm115 = vcmp.eq.s32.totalorder %v101, %v51
    %vm116 = vcmp.eq.s32.totalorder %v108, %v51
    %v117 = vsel %vm109, 1, 0
    %v118 = vsel %vm110, 1, 0
    %v119 = vsel %vm111, 1, 0
    %v120 = vsel %vm112, 1, 0
    %v121 = vsel %vm113, 1, 0
    %v122 = vsel %vm114, 1, 0
    %v123 = vsel %vm115, 1, 0
    %v124 = vsel %vm116, 1, 0
    %v125 = vcvt.s32.f32 %v117
    %v126 = vcvt.s32.f32 %v118
    %v127 = vcvt.s32.f32 %v119
    %v128 = vcvt.s32.f32 %v120
    %v129 = vcvt.s32.f32 %v121
    %v130 = vcvt.s32.f32 %v122
    %v131 = vcvt.s32.f32 %v123
    %v132 = vcvt.s32.f32 %v124
    %v133 = vrot.slane %v125, 4
    %v134 = vadd.f32 %v125, %v133
    %v135 = vrot.slane %v134, 2
    %v136 = vadd.f32 %v134, %v135
    %v137 = vrot.slane %v136, 1
    %v138 = vadd.f32 %v136, %v137
    %v139 = vrot.slane %v126, 4
    %v140 = vadd.f32 %v126, %v139
    %v141 = vrot.slane %v140, 2
    %v142 = vadd.f32 %v140, %v141
    %v143 = vrot.slane %v142, 1
    %v144 = vadd.f32 %v142, %v143
    %v145 = vrot.slane %v127, 4
    %v146 = vadd.f32 %v127, %v145
    %v147 = vrot.slane %v146, 2
    %v148 = vadd.f32 %v146, %v147
    %v149 = vrot.slane %v148, 1
    %v150 = vadd.f32 %v148, %v149
    %v151 = vrot.slane %v128, 4
    %v152 = vadd.f32 %v128, %v151
    %v153 = vrot.slane %v152, 2
    %v154 = vadd.f32 %v152, %v153
    %v155 = vrot.slane %v154, 1
    %v156 = vadd.f32 %v154, %v155
    %v157 = vrot.slane %v129, 4
    %v158 = vadd.f32 %v129, %v157
    %v159 = vrot.slane %v158, 2
    %v160 = vadd.f32 %v158, %v159
    %v161 = vrot.slane %v160, 1
    %v162 = vadd.f32 %v160, %v161
    %v163 = vrot.slane %v130, 4
    %v164 = vadd.f32 %v130, %v163
    %v165 = vrot.slane %v164, 2
    %v166 = vadd.f32 %v164, %v165
    %v167 = vrot.slane %v166, 1
    %v168 = vadd.f32 %v166, %v167
    %v169 = vrot.slane %v131, 4
    %v170 = vadd.f32 %v131, %v169
    %v171 = vrot.slane %v170, 2
    %v172 = vadd.f32 %v170, %v171
    %v173 = vrot.slane %v172, 1
    %v174 = vadd.f32 %v172, %v173
    %v175 = vrot.slane %v132, 4
    %v176 = vadd.f32 %v132, %v175
    %v177 = vrot.slane %v176, 2
    %v178 = vadd.f32 %v176, %v177
    %v179 = vrot.slane %v178, 1
    %v180 = vadd.f32 %v178, %v179
    %v181 = vadd.f32 %v138, 0.0
    %v182 = vadd.f32 %v144, 0.0
    %v183 = vadd.f32 %v150, 0.0
    %v184 = vadd.f32 %v156, 0.0
    %v185 = vadd.f32 %v162, 0.0
    %v186 = vadd.f32 %v168, 0.0
    %v187 = vadd.f32 %v174, 0.0
    %v188 = vadd.f32 %v180, 0.0
    %v189 = vpack.c.bf16 %v181, %v181
    %v190 = vpack.c.bf16 %v182, %v182
    %v191 = vpack.c.bf16 %v183, %v183
    %v192 = vpack.c.bf16 %v184, %v184
    %v193 = vpack.c.bf16 %v185, %v185
    %v194 = vpack.c.bf16 %v186, %v186
    %v195 = vpack.c.bf16 %v187, %v187
    %v196 = vpack.c.bf16 %v188, %v188
    %v197 = vld [vmem:[#allocation2] sm:$0xf]
    %v198 = vld [vmem:[#allocation2 + $0x4] sm:$0xf]
    %v199 = vld [vmem:[#allocation2 + $0x8] sm:$0xf]
    %v200 = vld [vmem:[#allocation2 + $0xc] sm:$0xf]
    %v201 = vld [vmem:[#allocation2 + $0x10] sm:$0xf]
    %v202 = vld [vmem:[#allocation2 + $0x14] sm:$0xf]
    %v203 = vld [vmem:[#allocation2 + $0x18] sm:$0xf]
    %v204 = vld [vmem:[#allocation2 + $0x1c] sm:$0xf]
    %v205 = vld [vmem:[#allocation2 + $0x20] sm:$0xf]
    %v206 = vld [vmem:[#allocation2 + $0x24] sm:$0xf]
    %v207 = vld [vmem:[#allocation2 + $0x28] sm:$0xf]
    %v208 = vld [vmem:[#allocation2 + $0x2c] sm:$0xf]
    %v209 = vld [vmem:[#allocation2 + $0x30] sm:$0xf]
    %v210 = vld [vmem:[#allocation2 + $0x34] sm:$0xf]
    %v211 = vld [vmem:[#allocation2 + $0x38] sm:$0xf]
    %v212 = vld [vmem:[#allocation2 + $0x3c] sm:$0xf]
    %v221 = vunpack.c.l.b16 %v189
    %v222 = vunpack.c.l.b16 %v190
    %v223 = vunpack.c.l.b16 %v191
    %v224 = vunpack.c.l.b16 %v192
    %v225 = vunpack.c.l.b16 %v193
    %v226 = vunpack.c.l.b16 %v194
    %v227 = vunpack.c.l.b16 %v195
    %v228 = vunpack.c.l.b16 %v196
    %vm229 = vcmask 1041409
    %v230 = vsel %vm229, %v222, %v221
    %vm231 = vcmask 1042434
    %v232 = vsel %vm231, %v223, %v230
    %vm233 = vcmask 1043459
    %v234 = vsel %vm233, %v224, %v232
    %vm235 = vcmask 1044484
    %v236 = vsel %vm235, %v225, %v234
    %vm237 = vcmask 1045509
    %v238 = vsel %vm237, %v226, %v236
    %vm239 = vcmask 1046534
    %v240 = vsel %vm239, %v227, %v238
    %vm241 = vcmask 1047559
    %v242 = vsel %vm241, %v228, %v240
    %v243 = vpack.c.b16 %v242, %v242
    %v261 = vunpack.c.l.b16 %v197
    %v262 = vunpack.c.l.b16 %v198
    %v263 = vunpack.c.l.b16 %v199
    %v264 = vunpack.c.l.b16 %v200
    %v265 = vunpack.c.l.b16 %v201
    %v266 = vunpack.c.l.b16 %v202
    %v267 = vunpack.c.l.b16 %v203
    %v268 = vunpack.c.l.b16 %v204
    %v269 = vunpack.c.l.b16 %v205
    %v270 = vunpack.c.l.b16 %v206
    %v271 = vunpack.c.l.b16 %v207
    %v272 = vunpack.c.l.b16 %v208
    %v273 = vunpack.c.l.b16 %v209
    %v274 = vunpack.c.l.b16 %v210
    %v275 = vunpack.c.l.b16 %v211
    %v276 = vunpack.c.l.b16 %v212
    %v277 = vpack.c.b16 %v262, %v261
    %v278 = vpack.c.b16 %v264, %v263
    %v279 = vpack.c.b16 %v266, %v265
    %v280 = vpack.c.b16 %v268, %v267
    %v281 = vpack.c.b16 %v270, %v269
    %v282 = vpack.c.b16 %v272, %v271
    %v283 = vpack.c.b16 %v274, %v273
    %v284 = vpack.c.b16 %v276, %v275
    %293 = vmatprep.subr.bf16.mxu0 0
    %294 = vmatpush1.bf16.msra.mxu0 %v277
    %295 = vmatprep.subr.bf16.mxu0 0
    %296 = vmatpush1.bf16.msra.mxu0 %v278
    %297 = vmatprep.subr.bf16.mxu0 0
    %298 = vmatpush1.bf16.msra.mxu0 %v279
    %299 = vmatprep.subr.bf16.mxu0 0
    %300 = vmatpush1.bf16.msra.mxu0 %v280
    %301 = vmatprep.subr.bf16.mxu0 0
    %302 = vmatpush1.bf16.msra.mxu0 %v281
    %303 = vmatprep.subr.bf16.mxu0 0
    %304 = vmatpush1.bf16.msra.mxu0 %v282
    %305 = vmatprep.subr.bf16.mxu0 0
    %306 = vmatpush1.bf16.msra.mxu0 %v283
    %307 = vmatprep.subr.bf16.mxu0 0
    %308 = vmatpush1.bf16.msra.mxu0 %v284
    %309 = vmatprep.subr.bf16.mxu0 0
    %310 = vmatpush1.bf16.msra.mxu0 0
    %311 = vmatprep.subr.bf16.mxu0 0
    %312 = vmatpush1.bf16.msra.mxu0 0
    %313 = vmatprep.subr.bf16.mxu0 0
    %314 = vmatpush1.bf16.msra.mxu0 0
    %315 = vmatprep.subr.bf16.mxu0 0
    %316 = vmatpush1.bf16.msra.mxu0 0
    %317 = vmatprep.subr.bf16.mxu0 0
    %318 = vmatpush1.bf16.msra.mxu0 0
    %319 = vmatprep.subr.bf16.mxu0 0
    %320 = vmatpush1.bf16.msra.mxu0 0
    %321 = vmatprep.subr.bf16.mxu0 0
    %322 = vmatpush1.bf16.msra.mxu0 0
    %323 = vmatprep.subr.bf16.mxu0 0
    %324 = vmatpush1.bf16.msra.mxu0 0
    %325 = vmatprep.mubr.bf16.mxu0 0
    %326 = vmatmul.mubr.bf16.gmra.mrb[0].mxu0 %v243
    %v327 = vpop.f32.mrb[0].mxu0
    %v328 = vadd.f32 0.0, %v327
    %v329 = vpop.f32.mrb[0].mxu0
    %v330 = vpop.f32.mrb[0].mxu0
    %v331 = vpop.f32.mrb[0].mxu0
    %332 = vdwg.mxu0
    %v333 = vld [vmem:[%s1] sm:$0xff]
    %v334 = vrcp.pop %v333
    %336 = vset.pattern.permute.xlu0 0
    %337 = vperm.xlu0 %336, %v334
    %v338 = vpop.permute.xlu0 %337
    %v340 = vmul.f32 %v328, %v338
    %v341 = vpack.c.bf16 %v340, %v340
    %v342 = vld [vmem:[#allocation5] sm:$0xf]
    %v343 = vld [vmem:[#allocation5 + $0x4] sm:$0xf]
    %v344 = vld [vmem:[#allocation5 + $0x8] sm:$0xf]
    %v345 = vld [vmem:[#allocation5 + $0xc] sm:$0xf]
    %v346 = vld [vmem:[#allocation5 + $0x10] sm:$0xf]
    %v347 = vld [vmem:[#allocation5 + $0x14] sm:$0xf]
    %v348 = vld [vmem:[#allocation5 + $0x18] sm:$0xf]
    %v349 = vld [vmem:[#allocation5 + $0x1c] sm:$0xf]
    %v350 = vld [vmem:[#allocation5 + $0x20] sm:$0xf]
    %v351 = vld [vmem:[#allocation5 + $0x24] sm:$0xf]
    %v352 = vld [vmem:[#allocation5 + $0x28] sm:$0xf]
    %v353 = vld [vmem:[#allocation5 + $0x2c] sm:$0xf]
    %v354 = vld [vmem:[#allocation5 + $0x30] sm:$0xf]
    %v355 = vld [vmem:[#allocation5 + $0x34] sm:$0xf]
    %v356 = vld [vmem:[#allocation5 + $0x38] sm:$0xf]
    %v357 = vld [vmem:[#allocation5 + $0x3c] sm:$0xf]
    %v358 = vld [vmem:[%s4] sm:$0x1]
    %v360 = vlaneseq
    %v361 = vshrl.u32 %v360, 7
    %v362 = vsub.s32 0, %v361
    %v363 = vrot.slane %v358, %v362
    %v381 = vunpack.c.l.b16 %v342
    %v382 = vunpack.c.l.b16 %v343
    %v383 = vunpack.c.l.b16 %v344
    %v384 = vunpack.c.l.b16 %v345
    %v385 = vunpack.c.l.b16 %v346
    %v386 = vunpack.c.l.b16 %v347
    %v387 = vunpack.c.l.b16 %v348
    %v388 = vunpack.c.l.b16 %v349
    %v389 = vunpack.c.l.b16 %v350
    %v390 = vunpack.c.l.b16 %v351
    %v391 = vunpack.c.l.b16 %v352
    %v392 = vunpack.c.l.b16 %v353
    %v393 = vunpack.c.l.b16 %v354
    %v394 = vunpack.c.l.b16 %v355
    %v395 = vunpack.c.l.b16 %v356
    %v396 = vunpack.c.l.b16 %v357
    %v397 = vpack.c.b16 %v382, %v381
    %v398 = vpack.c.b16 %v384, %v383
    %v399 = vpack.c.b16 %v386, %v385
    %v400 = vpack.c.b16 %v388, %v387
    %v401 = vpack.c.b16 %v390, %v389
    %v402 = vpack.c.b16 %v392, %v391
    %v403 = vpack.c.b16 %v394, %v393
    %v404 = vpack.c.b16 %v396, %v395
    %413 = vmatprep.subr.bf16.mxu0 0
    %414 = vmatpush1.bf16.msra.mxu0 %v397
    %415 = vmatprep.subr.bf16.mxu0 0
    %416 = vmatpush1.bf16.msra.mxu0 %v398
    %417 = vmatprep.subr.bf16.mxu0 0
    %418 = vmatpush1.bf16.msra.mxu0 %v399
    %419 = vmatprep.subr.bf16.mxu0 0
    %420 = vmatpush1.bf16.msra.mxu0 %v400
    %421 = vmatprep.subr.bf16.mxu0 0
    %422 = vmatpush1.bf16.msra.mxu0 %v401
    %423 = vmatprep.subr.bf16.mxu0 0
    %424 = vmatpush1.bf16.msra.mxu0 %v402
    %425 = vmatprep.subr.bf16.mxu0 0
    %426 = vmatpush1.bf16.msra.mxu0 %v403
    %427 = vmatprep.subr.bf16.mxu0 0
    %428 = vmatpush1.bf16.msra.mxu0 %v404
    %429 = vmatprep.subr.bf16.mxu0 0
    %430 = vmatpush1.bf16.msra.mxu0 0
    %431 = vmatprep.subr.bf16.mxu0 0
    %432 = vmatpush1.bf16.msra.mxu0 0
    %433 = vmatprep.subr.bf16.mxu0 0
    %434 = vmatpush1.bf16.msra.mxu0 0
    %435 = vmatprep.subr.bf16.mxu0 0
    %436 = vmatpush1.bf16.msra.mxu0 0
    %437 = vmatprep.subr.bf16.mxu0 0
    %438 = vmatpush1.bf16.msra.mxu0 0
    %439 = vmatprep.subr.bf16.mxu0 0
    %440 = vmatpush1.bf16.msra.mxu0 0
    %441 = vmatprep.subr.bf16.mxu0 0
    %442 = vmatpush1.bf16.msra.mxu0 0
    %443 = vmatprep.subr.bf16.mxu0 0
    %444 = vmatpush1.bf16.msra.mxu0 0
    %445 = vmatprep.mubr.bf16.mxu0 0
    %446 = vmatmul.mubr.bf16.gmra.mrb[0].mxu0 %v341
    %v447 = vpop.f32.mrb[0].mxu0
    %v448 = vadd.f32 %v363, %v447
    %v449 = vpop.f32.mrb[0].mxu0
    %v450 = vpop.f32.mrb[0].mxu0
    %v451 = vpop.f32.mrb[0].mxu0
    %452 = vdwg.mxu0
    %453 = vst [vmem:[#allocation7] sm:$0xff] %v448
    // Predicated region
    $region30: #{tpu_custom_call.1} parent=1 // pred_check
      _
    $region31: #{tpu_custom_call.1} parent=1 // pred_check_branch
      %455 = sbr.rel (0) target = $region33
    $region32: #{tpu_custom_call.1} parent=1 // pred_region
      %s457 = ssub.s32 128, 128
      %458 = vsyncadd [#allocation4], %s457
      %s460 = sshll.u32 [#allocation7], 4
      %s461 = int_to_ptr.vmem [resolvable:$true] %s460
      %463 = dma.vmem_to_hbm [thread:$0]  %s461, 128, %s5, [#allocation4]
    $region33: #{tpu_custom_call.1} parent=1 // pred_fallthru
      _
    // Predicated region
    $region34: #{tpu_custom_call.1} parent=1 // pred_check
      _
    $region35: #{tpu_custom_call.1} parent=1 // pred_check_branch
      %465 = sbr.rel (0) target = $region37
    $region36: #{tpu_custom_call.1} parent=1 // pred_region
      %466 = dma.done [#allocation4], 128
    $region37: #{tpu_custom_call.1} parent=1 // pred_fallthru
      _
    %467 = vsyncpa [#allocation3], 1
    %468 = vsyncpa [#allocation6], 1
    %469 = vsyncpa [#allocation4], 1

</llo_original>
